<compile_context>
chip_gen: v7x
topology: tpu7x:2x2x1
jax: 0.10.0
libtpu: 0.0.40
codegen_flags: <defaults>
</compile_context>

<pallas_src>
import functools

import jax
import jax.numpy as jnp
from jax import lax
from jax.experimental import pallas as pl
from jax.experimental.pallas import tpu as pltpu

BN_EPS = 1e-5                      # PyTorch BatchNorm1d default eps
TILE = 256                         # row / reduction tile (MXU-friendly)
FUSED_MAX_N = 1024                 # below this, run the whole layer fused
VMEM_LIMIT = 48 * 1024 * 1024      # <= v7x physical 64 MiB; ample for TILE=256


# --------------------------------------------------------------------------- #
# Fused single-block kernel (small N): whole layer in one pallas_call.
# --------------------------------------------------------------------------- #
def _gin_fused_kernel(n_real, eps_ref, a_ref, v_ref, w1_ref, b1_ref,
                      g1_ref, be1_ref, w2_ref, b2_ref, g2_ref, be2_ref, o_ref):
    inv_n = 1.0 / n_real

    a = a_ref[...].astype(jnp.bfloat16)          # adjacency cast after DMA
    v = v_ref[...]                               # bf16
    agg = (jnp.dot(a, v, preferred_element_type=jnp.float32)
           + eps_ref[0, 0] * v.astype(jnp.float32))

    h = jnp.dot(agg.astype(jnp.bfloat16), w1_ref[...],
                preferred_element_type=jnp.float32) + b1_ref[...]

    s = jnp.sum(h, axis=0, keepdims=True)
    s2 = jnp.sum(h * h, axis=0, keepdims=True)
    mean = s * inv_n
    var = jnp.maximum(s2 * inv_n - mean * mean, 0.0)
    h = jnp.maximum((h - mean) * (lax.rsqrt(var + BN_EPS) * g1_ref[...])
                    + be1_ref[...], 0.0)

    o = jnp.dot(h.astype(jnp.bfloat16), w2_ref[...],
                preferred_element_type=jnp.float32) + b2_ref[...]

    s = jnp.sum(o, axis=0, keepdims=True)
    s2 = jnp.sum(o * o, axis=0, keepdims=True)
    mean = s * inv_n
    var = jnp.maximum(s2 * inv_n - mean * mean, 0.0)
    o_ref[...] = jnp.maximum((o - mean) * (lax.rsqrt(var + BN_EPS) * g2_ref[...])
                             + be2_ref[...], 0.0)


# --------------------------------------------------------------------------- #
# Tiled kernel 1: K-tiled GIN aggregation + Linear1 + partial BN1 stats.
#   acc += A[i,k] @ V[k]   (bf16 operands, f32 accumulate)
#   at last k: h = (acc + eps*V[i]) @ W1 + b1   (masked rows zeroed)
#              emit h (bf16) and per-tile [sum; sum_sq] of h.
# --------------------------------------------------------------------------- #
def _gin_agg_linear1_kernel(n_real, eps_ref, a_ref, vi_ref, vk_ref, w1_ref,
                            b1_ref, h_ref, st_ref, acc_ref):
    i = pl.program_id(0)
    k = pl.program_id(1)

    @pl.when(k == 0)
    def _():
        acc_ref[...] = jnp.zeros_like(acc_ref)

    a = a_ref[...].astype(jnp.bfloat16)          # int8/f32 adjacency -> bf16 MXU
    acc_ref[...] += jnp.dot(a, vk_ref[...], preferred_element_type=jnp.float32)

    @pl.when(k == pl.num_programs(1) - 1)
    def _():
        agg = acc_ref[...] + eps_ref[0, 0] * vi_ref[...].astype(jnp.float32)
        h = jnp.dot(agg.astype(jnp.bfloat16), w1_ref[...],
                    preferred_element_type=jnp.float32) + b1_ref[...]
        tm, hp_dim = h.shape
        rows = lax.broadcasted_iota(jnp.int32, h.shape, 0) + i * tm
        h = jnp.where(rows < n_real, h, 0.0)     # padded rows -> exact zeros
        h_ref[...] = h.astype(h_ref.dtype)

        s = jnp.sum(h, axis=0, keepdims=True)
        s2 = jnp.sum(h * h, axis=0, keepdims=True)
        st_ref[...] = jnp.concatenate(
            [s, s2, jnp.zeros((6, hp_dim), jnp.float32)], axis=0)


# --------------------------------------------------------------------------- #
# Tiled kernel 2: BN1(affine) -> ReLU -> Linear2 + partial BN2 stats.
# --------------------------------------------------------------------------- #
def _gin_bn1_linear2_kernel(n_real, h_ref, sc1_ref, sh1_ref, w2_ref, b2_ref,
                            o_ref, st_ref):
    i = pl.program_id(0)
    h = h_ref[...].astype(jnp.float32)
    h = jnp.maximum(h * sc1_ref[...] + sh1_ref[...], 0.0)

    o = jnp.dot(h.astype(jnp.bfloat16), w2_ref[...],
                preferred_element_type=jnp.float32) + b2_ref[...]
    tm, do_dim = o.shape
    rows = lax.broadcasted_iota(jnp.int32, o.shape, 0) + i * tm
    o = jnp.where(rows < n_real, o, 0.0)
    o_ref[...] = o.astype(o_ref.dtype)

    s = jnp.sum(o, axis=0, keepdims=True)
    s2 = jnp.sum(o * o, axis=0, keepdims=True)
    st_ref[...] = jnp.concatenate(
        [s, s2, jnp.zeros((6, do_dim), jnp.float32)], axis=0)


# --------------------------------------------------------------------------- #
# Tiled kernel 3: BN2(affine) -> ReLU (pure VPU, row-tiled).
# --------------------------------------------------------------------------- #
def _gin_bn2_relu_kernel(o_ref, sc2_ref, sh2_ref, out_ref):
    o = o_ref[...].astype(jnp.float32)
    out_ref[...] = jnp.maximum(o * sc2_ref[...] + sh2_ref[...], 0.0)


# --------------------------------------------------------------------------- #
# Wrapper helpers
# --------------------------------------------------------------------------- #
def _round_up(x, m):
    return ((x + m - 1) // m) * m


def _pad2(x, shape, value=0):
    """Pad a 2D array up to `shape` (bottom / right) with `value`."""
    pads = [(0, s - d) for s, d in zip(shape, x.shape)]
    if all(p == (0, 0) for p in pads):
        return x
    return jnp.pad(x, pads, constant_values=value)


def _bn_affine_from_stats(stats, n, gamma, beta):
    """Finalize BN train-mode scale/shift from per-tile [sum; sum_sq] stats."""
    s = jnp.sum(stats[:, 0, :], axis=0, keepdims=True)
    s2 = jnp.sum(stats[:, 1, :], axis=0, keepdims=True)
    mean = s / n
    var = jnp.maximum(s2 / n - mean * mean, 0.0)     # clamp: avoid rsqrt(NaN)
    scale = gamma * lax.rsqrt(var + BN_EPS)
    shift = beta - mean * scale
    return scale, shift


# --------------------------------------------------------------------------- #
# Forward
# --------------------------------------------------------------------------- #
@functools.partial(jax.jit, static_argnames=("force_tiled",))
def layer_gin_forward(v, a, params, force_tiled=False):
    """Pallas-backed LayerGIN.forward(v, a). `a` may be int8 (0/1) or float."""
    eps, w1, b1, g1, be1, w2, b2, g2, be2 = params
    n, d_in = v.shape
    hidden = w1.shape[1]
    d_out = w2.shape[1]

    # Lane-dense (128-multiple) feature dims; padding columns are exact no-ops.
    dp_in = _round_up(d_in, 128)
    hp = _round_up(hidden, 128)
    dp_out = _round_up(d_out, 128)

    bf = jnp.bfloat16
    v_p = _pad2(v, (n, dp_in)).astype(bf)
    w1_p = _pad2(w1, (dp_in, hp)).astype(bf)
    b1_p = _pad2(b1, (1, hp))
    g1_p = _pad2(g1, (1, hp), 1.0)
    be1_p = _pad2(be1, (1, hp))
    w2_p = _pad2(w2, (hp, dp_out)).astype(bf)
    b2_p = _pad2(b2, (1, dp_out))
    g2_p = _pad2(g2, (1, dp_out), 1.0)
    be2_p = _pad2(be2, (1, dp_out))
    eps = eps.astype(jnp.float32)

    # ---------------- small-N fused path: one launch, no h_pre round trip ----
    if (not force_tiled) and n <= FUSED_MAX_N:
        flops = (2 * n * n * dp_in + 2 * n * dp_in * hp
                 + 2 * n * hp * dp_out + 10 * n * (hp + dp_out))
        bytes_acc = (a.size * a.dtype.itemsize + v_p.size * 2
                     + w1_p.size * 2 + w2_p.size * 2 + n * dp_out * 4)
        out_p = pl.pallas_call(
            functools.partial(_gin_fused_kernel, n),
            grid=(1,),
            in_specs=[
                pl.BlockSpec(memory_space=pltpu.MemorySpace.SMEM),   # epsilon
                pl.BlockSpec((n, n), lambda i: (0, 0)),              # A
                pl.BlockSpec((n, dp_in), lambda i: (0, 0)),          # V
                pl.BlockSpec((dp_in, hp), lambda i: (0, 0)),         # W1
                pl.BlockSpec((1, hp), lambda i: (0, 0)),             # b1
                pl.BlockSpec((1, hp), lambda i: (0, 0)),             # gamma1
                pl.BlockSpec((1, hp), lambda i: (0, 0)),             # beta1
                pl.BlockSpec((hp, dp_out), lambda i: (0, 0)),        # W2
                pl.BlockSpec((1, dp_out), lambda i: (0, 0)),         # b2
                pl.BlockSpec((1, dp_out), lambda i: (0, 0)),         # gamma2
                pl.BlockSpec((1, dp_out), lambda i: (0, 0)),         # beta2
            ],
            out_specs=pl.BlockSpec((n, dp_out), lambda i: (0, 0)),
            out_shape=jax.ShapeDtypeStruct((n, dp_out), jnp.float32),
            compiler_params=pltpu.CompilerParams(
                dimension_semantics=("arbitrary",),
                vmem_limit_bytes=VMEM_LIMIT),
            cost_estimate=pl.CostEstimate(
                flops=int(flops), transcendentals=int(2 * (hp + dp_out)),
                bytes_accessed=int(bytes_acc)),
        )(eps, a, v_p, w1_p, b1_p, g1_p, be1_p, w2_p, b2_p, g2_p, be2_p)
        return out_p[:, :d_out]

    # ---------------- scalable tiled path -----------------------------------
    n_pad = _round_up(n, TILE)
    nt = n_pad // TILE
    a_p = _pad2(a, (n_pad, n_pad))                # zero rows/cols: exact no-ops
    v_pp = _pad2(v_p, (n_pad, dp_in))

    # Kernel 1: K-tiled aggregation + Linear1 + partial BN1 stats.
    flops1 = 2 * n_pad * n_pad * dp_in + 2 * n_pad * dp_in * hp
    bytes1 = (a_p.size * a_p.dtype.itemsize + (nt + 1) * v_pp.size * 2
              + w1_p.size * 2 + n_pad * hp * 2 + nt * 8 * hp * 4)
    h_pre, st1 = pl.pallas_call(
        functools.partial(_gin_agg_linear1_kernel, n),
        grid=(nt, nt),
        in_specs=[
            pl.BlockSpec(memory_space=pltpu.MemorySpace.SMEM),          # eps
            pl.BlockSpec((TILE, TILE), lambda i, k: (i, k)),            # A tile
            pl.BlockSpec((TILE, dp_in), lambda i, k: (i, 0)),           # V[i] (eps term)
            pl.BlockSpec((TILE, dp_in), lambda i, k: (k, 0)),           # V[k] (A@V)
            pl.BlockSpec((dp_in, hp), lambda i, k: (0, 0)),             # W1
            pl.BlockSpec((1, hp), lambda i, k: (0, 0)),                 # b1
        ],
        out_specs=[
            pl.BlockSpec((TILE, hp), lambda i, k: (i, 0)),              # h (bf16)
            pl.BlockSpec((None, 8, hp), lambda i, k: (i, 0, 0)),        # stats
        ],
        out_shape=(jax.ShapeDtypeStruct((n_pad, hp), jnp.bfloat16),
                   jax.ShapeDtypeStruct((nt, 8, hp), jnp.float32)),
        scratch_shapes=[pltpu.VMEM((TILE, dp_in), jnp.float32)],
        compiler_params=pltpu.CompilerParams(
            dimension_semantics=("parallel", "arbitrary"),
            vmem_limit_bytes=VMEM_LIMIT),
        cost_estimate=pl.CostEstimate(flops=int(flops1), transcendentals=0,
                                      bytes_accessed=int(bytes1)),
    )(eps, a_p, v_pp, v_pp, w1_p, b1_p)

    sc1, sh1 = _bn_affine_from_stats(st1, n, g1_p, be1_p)

    # Kernel 2: BN1 -> ReLU -> Linear2 + partial BN2 stats (row-tiled).
    flops2 = 2 * n_pad * hp * dp_out + 6 * n_pad * (hp + dp_out)
    bytes2 = (n_pad * hp * 2 + w2_p.size * 2 + n_pad * dp_out * 2
              + nt * 8 * dp_out * 4)
    o_pre, st2 = pl.pallas_call(
        functools.partial(_gin_bn1_linear2_kernel, n),
        grid=(nt,),
        in_specs=[
            pl.BlockSpec((TILE, hp), lambda i: (i, 0)),                 # h tile
            pl.BlockSpec((1, hp), lambda i: (0, 0)),                    # BN1 scale
            pl.BlockSpec((1, hp), lambda i: (0, 0)),                    # BN1 shift
            pl.BlockSpec((hp, dp_out), lambda i: (0, 0)),               # W2
            pl.BlockSpec((1, dp_out), lambda i: (0, 0)),                # b2
        ],
        out_specs=[
            pl.BlockSpec((TILE, dp_out), lambda i: (i, 0)),             # o (bf16)
            pl.BlockSpec((None, 8, dp_out), lambda i: (i, 0, 0)),       # stats
        ],
        out_shape=(jax.ShapeDtypeStruct((n_pad, dp_out), jnp.bfloat16),
                   jax.ShapeDtypeStruct((nt, 8, dp_out), jnp.float32)),
        compiler_params=pltpu.CompilerParams(
            dimension_semantics=("parallel",),
            vmem_limit_bytes=VMEM_LIMIT),
        cost_estimate=pl.CostEstimate(flops=int(flops2), transcendentals=0,
                                      bytes_accessed=int(bytes2)),
    )(h_pre, sc1, sh1, w2_p, b2_p)

    sc2, sh2 = _bn_affine_from_stats(st2, n, g2_p, be2_p)

    # Kernel 3: BN2 -> ReLU (row-tiled).
    out_p = pl.pallas_call(
        _gin_bn2_relu_kernel,
        grid=(nt,),
        in_specs=[
            pl.BlockSpec((TILE, dp_out), lambda i: (i, 0)),
            pl.BlockSpec((1, dp_out), lambda i: (0, 0)),
            pl.BlockSpec((1, dp_out), lambda i: (0, 0)),
        ],
        out_specs=pl.BlockSpec((TILE, dp_out), lambda i: (i, 0)),
        out_shape=jax.ShapeDtypeStruct((n_pad, dp_out), jnp.float32),
        compiler_params=pltpu.CompilerParams(
            dimension_semantics=("parallel",),
            vmem_limit_bytes=VMEM_LIMIT),
        cost_estimate=pl.CostEstimate(
            flops=int(3 * n_pad * dp_out), transcendentals=0,
            bytes_accessed=int(n_pad * dp_out * 6)),
    )(o_pre, sc2, sh2)

    return out_p[:n, :d_out]


# --------------------------------------------------------------------------- #
# Pure-JAX reference mirroring the PyTorch forward (train-mode BN) with the
# same bf16 MXU-operand casts / f32 accumulation the kernels use.
# --------------------------------------------------------------------------- #
def _reference_forward(v, a, params):
    eps, w1, b1, g1, be1, w2, b2, g2, be2 = params
    bf, f32 = jnp.bfloat16, jnp.float32

    a_bf, v_bf = a.astype(bf), v.astype(bf)
    agg = (jnp.dot(a_bf, v_bf, preferred_element_type=f32)
           + eps[0, 0] * v_bf.astype(f32))

    h = jnp.dot(agg.astype(bf), w1.astype(bf), preferred_element_type=f32) + b1
    mean = jnp.mean(h, 0, keepdims=True)
    var = jnp.maximum(jnp.mean(h * h, 0, keepdims=True) - mean * mean, 0.0)
    h = jnp.maximum((h - mean) * lax.rsqrt(var + BN_EPS) * g1 + be1, 0.0)

    o = jnp.dot(h.astype(bf), w2.astype(bf), preferred_element_type=f32) + b2
    mean = jnp.mean(o, 0, keepdims=True)
    var = jnp.maximum(jnp.mean(o * o, 0, keepdims=True) - mean * mean, 0.0)
    return jnp.maximum((o - mean) * lax.rsqrt(var + BN_EPS) * g2 + be2, 0.0)


def init_params(key, input_dim, hidden_dim, output_dim):
    """Deterministic parameter init matching the module's shapes."""
    k1, k2, k3, k4 = jax.random.split(key, 4)
    # nn.Parameter(torch.Tensor([[0.0]])) -> scalar epsilon, init 0.0
    eps = jnp.zeros((1, 1), jnp.float32)
    # Linear weights stored pre-transposed: [in, out] so the kernel does x @ W
    lim1 = 1.0 / jnp.sqrt(input_dim)
    w1 = jax.random.uniform(k1, (input_dim, hidden_dim), jnp.float32, -lim1, lim1)
    b1 = jax.random.uniform(k2, (1, hidden_dim), jnp.float32, -lim1, lim1)
    lim2 = 1.0 / jnp.sqrt(hidden_dim)
    w2 = jax.random.uniform(k3, (hidden_dim, output_dim), jnp.float32, -lim2, lim2)
    b2 = jax.random.uniform(k4, (1, output_dim), jnp.float32, -lim2, lim2)
    # BatchNorm1d affine params: weight=1, bias=0 (PyTorch defaults)
    g1 = jnp.ones((1, hidden_dim), jnp.float32)
    be1 = jnp.zeros((1, hidden_dim), jnp.float32)
    g2 = jnp.ones((1, output_dim), jnp.float32)
    be2 = jnp.zeros((1, output_dim), jnp.float32)
    return (eps, w1, b1, g1, be1, w2, b2, g2, be2)


if __name__ == "__main__":
    D_IN, HIDDEN, D_OUT = 16, 32, 16

    key = jax.random.PRNGKey(0)
    k_p, k_data = jax.random.split(key)
    params = init_params(k_p, D_IN, HIDDEN, D_OUT)
    # Exercise the eps * V term with a non-trivial epsilon value.
    params = (jnp.full((1, 1), 0.3, jnp.float32),) + params[1:]

    # (N=64, fused single-block path) and (N=320, forced tiled path w/ padding)
    for n, force_tiled in ((64, False), (320, True)):
        k_v, k_a, k_data = jax.random.split(k_data, 3)
        v = jax.random.normal(k_v, (n, D_IN), jnp.float32)
        # 0/1 adjacency stored as int8 (exact; 1 byte/edge of HBM traffic),
        # densified (torch.sparse.mm semantics); cast to bf16 inside the kernel.
        a = (jax.random.uniform(k_a, (n, n)) < 0.1).astype(jnp.int8)

        out = layer_gin_forward(v, a, params, force_tiled=force_tiled)
        out = jax.block_until_ready(out)
        ref = _reference_forward(v, a, params)

        assert out.shape == (n, D_OUT)
        # bf16 matmul operands + bf16 intermediate activations -> loosened tol
        assert jnp.allclose(out, ref, atol=3e-2, rtol=3e-2), (
            f"mismatch vs reference (n={n}, tiled={force_tiled})")

    print("KERNEL_OK")
</pallas_src>

<mosaic_0001>
module attributes {stable_mosaic.version = 11 : i64} {
  func.func @_gin_fused_kernel(%arg0: i32, %arg1: memref<1x1xf32, #tpu.memory_space<smem>>, %arg2: memref<64x64xi8, #tpu.memory_space<vmem>>, %arg3: memref<64x128xbf16, #tpu.memory_space<vmem>>, %arg4: memref<128x128xbf16, #tpu.memory_space<vmem>>, %arg5: memref<1x128xf32, #tpu.memory_space<vmem>>, %arg6: memref<1x128xf32, #tpu.memory_space<vmem>>, %arg7: memref<1x128xf32, #tpu.memory_space<vmem>>, %arg8: memref<128x128xbf16, #tpu.memory_space<vmem>>, %arg9: memref<1x128xf32, #tpu.memory_space<vmem>>, %arg10: memref<1x128xf32, #tpu.memory_space<vmem>>, %arg11: memref<1x128xf32, #tpu.memory_space<vmem>>, %arg12: memref<64x128xf32, #tpu.memory_space<vmem>>) attributes {dimension_semantics = [#tpu.dimension_semantics<arbitrary>], iteration_bounds = array<i64: 1>, scalar_prefetch = 0 : i64, scratch_operands = 0 : i64, tpu.core_type = #tpu.core_type<tc>, window_params = [{transform_indices = @transform_0, window_bounds = array<i64: 1, 1>}, {pipeline_mode = #tpu.pipeline_mode<synchronous>, transform_indices = @transform_1, window_bounds = array<i64: 64, 64>}, {pipeline_mode = #tpu.pipeline_mode<synchronous>, transform_indices = @transform_2, window_bounds = array<i64: 64, 128>}, {pipeline_mode = #tpu.pipeline_mode<synchronous>, transform_indices = @transform_3, window_bounds = array<i64: 128, 128>}, {pipeline_mode = #tpu.pipeline_mode<synchronous>, transform_indices = @transform_4, window_bounds = array<i64: 1, 128>}, {pipeline_mode = #tpu.pipeline_mode<synchronous>, transform_indices = @transform_5, window_bounds = array<i64: 1, 128>}, {pipeline_mode = #tpu.pipeline_mode<synchronous>, transform_indices = @transform_6, window_bounds = array<i64: 1, 128>}, {pipeline_mode = #tpu.pipeline_mode<synchronous>, transform_indices = @transform_7, window_bounds = array<i64: 128, 128>}, {pipeline_mode = #tpu.pipeline_mode<synchronous>, transform_indices = @transform_8, window_bounds = array<i64: 1, 128>}, {pipeline_mode = #tpu.pipeline_mode<synchronous>, transform_indices = @transform_9, window_bounds = array<i64: 1, 128>}, {pipeline_mode = #tpu.pipeline_mode<synchronous>, transform_indices = @transform_10, window_bounds = array<i64: 1, 128>}, {pipeline_mode = #tpu.pipeline_mode<synchronous>, transform_indices = @transform_11, window_bounds = array<i64: 64, 128>}]} {
    %c0 = arith.constant 0 : index
    %c0_0 = arith.constant 0 : index
    %0 = vector.load %arg2[%c0, %c0_0] : memref<64x64xi8, #tpu.memory_space<vmem>>, vector<64x64xi8>
    %1 = arith.sitofp %0 : vector<64x64xi8> to vector<64x64xbf16>
    %c0_1 = arith.constant 0 : index
    %c0_2 = arith.constant 0 : index
    %2 = vector.load %arg3[%c0_1, %c0_2] : memref<64x128xbf16, #tpu.memory_space<vmem>>, vector<64x128xbf16>
    %cst = arith.constant dense<0.000000e+00> : vector<64x128xf32>
    %3 = tpu.matmul %1, %2, %cst {dimension_numbers = #tpu.dot_dimension_numbers<[1], [0], [0], [1], [0, 0, 1, 1], [], []>} : vector<64x64xbf16>, vector<64x128xbf16>, vector<64x128xf32> -> vector<64x128xf32>
    %c0_3 = arith.constant 0 : index
    %c0_4 = arith.constant 0 : index
    %4 = memref.load %arg1[%c0_3, %c0_4] : memref<1x1xf32, #tpu.memory_space<smem>>
    %5 = arith.extf %2 : vector<64x128xbf16> to vector<64x128xf32>
    %6 = vector.broadcast %4 : f32 to vector<64x128xf32>
    %7 = arith.mulf %6, %5 : vector<64x128xf32>
    %8 = arith.addf %3, %7 : vector<64x128xf32>
    %9 = arith.truncf %8 : vector<64x128xf32> to vector<64x128xbf16>
    %c0_5 = arith.constant 0 : index
    %c0_6 = arith.constant 0 : index
    %10 = vector.load %arg4[%c0_5, %c0_6] : memref<128x128xbf16, #tpu.memory_space<vmem>>, vector<128x128xbf16>
    %cst_7 = arith.constant dense<0.000000e+00> : vector<64x128xf32>
    %11 = tpu.matmul %9, %10, %cst_7 {dimension_numbers = #tpu.dot_dimension_numbers<[1], [0], [0], [1], [0, 0, 1, 1], [], []>} : vector<64x128xbf16>, vector<128x128xbf16>, vector<64x128xf32> -> vector<64x128xf32>
    %c0_8 = arith.constant 0 : index
    %c0_9 = arith.constant 0 : index
    %12 = vector.load %arg5[%c0_8, %c0_9] : memref<1x128xf32, #tpu.memory_space<vmem>>, vector<1x128xf32>
    %13 = vector.broadcast %12 : vector<1x128xf32> to vector<64x128xf32>
    %14 = arith.addf %11, %13 : vector<64x128xf32>
    %cst_10 = arith.constant dense<0.000000e+00> : vector<128xf32>
    %15 = vector.multi_reduction <add>, %14, %cst_10 [0] : vector<64x128xf32> to vector<128xf32>
    %16 = vector.shape_cast %15 : vector<128xf32> to vector<1x128xf32>
    %17 = arith.mulf %14, %14 : vector<64x128xf32>
    %cst_11 = arith.constant dense<0.000000e+00> : vector<128xf32>
    %18 = vector.multi_reduction <add>, %17, %cst_11 [0] : vector<64x128xf32> to vector<128xf32>
    %19 = vector.shape_cast %18 : vector<128xf32> to vector<1x128xf32>
    %cst_12 = arith.constant 1.562500e-02 : f32
    %20 = vector.broadcast %cst_12 : f32 to vector<1x128xf32>
    %21 = arith.mulf %16, %20 : vector<1x128xf32>
    %cst_13 = arith.constant 1.562500e-02 : f32
    %22 = vector.broadcast %cst_13 : f32 to vector<1x128xf32>
    %23 = arith.mulf %19, %22 : vector<1x128xf32>
    %24 = arith.mulf %21, %21 : vector<1x128xf32>
    %25 = arith.subf %23, %24 : vector<1x128xf32>
    %cst_14 = arith.constant 0.000000e+00 : f32
    %26 = vector.broadcast %cst_14 : f32 to vector<1x128xf32>
    %27 = arith.maximumf %25, %26 : vector<1x128xf32>
    %28 = vector.broadcast %21 : vector<1x128xf32> to vector<64x128xf32>
    %29 = arith.subf %14, %28 : vector<64x128xf32>
    %cst_15 = arith.constant 9.99999974E-6 : f32
    %30 = vector.broadcast %cst_15 : f32 to vector<1x128xf32>
    %31 = arith.addf %27, %30 : vector<1x128xf32>
    %32 = math.rsqrt %31 : vector<1x128xf32>
    %c0_16 = arith.constant 0 : index
    %c0_17 = arith.constant 0 : index
    %33 = vector.load %arg6[%c0_16, %c0_17] : memref<1x128xf32, #tpu.memory_space<vmem>>, vector<1x128xf32>
    %34 = arith.mulf %32, %33 : vector<1x128xf32>
    %35 = vector.broadcast %34 : vector<1x128xf32> to vector<64x128xf32>
    %36 = arith.mulf %29, %35 : vector<64x128xf32>
    %c0_18 = arith.constant 0 : index
    %c0_19 = arith.constant 0 : index
    %37 = vector.load %arg7[%c0_18, %c0_19] : memref<1x128xf32, #tpu.memory_space<vmem>>, vector<1x128xf32>
    %38 = vector.broadcast %37 : vector<1x128xf32> to vector<64x128xf32>
    %39 = arith.addf %36, %38 : vector<64x128xf32>
    %cst_20 = arith.constant 0.000000e+00 : f32
    %40 = vector.broadcast %cst_20 : f32 to vector<64x128xf32>
    %41 = arith.maximumf %39, %40 : vector<64x128xf32>
    %42 = arith.truncf %41 : vector<64x128xf32> to vector<64x128xbf16>
    %c0_21 = arith.constant 0 : index
    %c0_22 = arith.constant 0 : index
    %43 = vector.load %arg8[%c0_21, %c0_22] : memref<128x128xbf16, #tpu.memory_space<vmem>>, vector<128x128xbf16>
    %cst_23 = arith.constant dense<0.000000e+00> : vector<64x128xf32>
    %44 = tpu.matmul %42, %43, %cst_23 {dimension_numbers = #tpu.dot_dimension_numbers<[1], [0], [0], [1], [0, 0, 1, 1], [], []>} : vector<64x128xbf16>, vector<128x128xbf16>, vector<64x128xf32> -> vector<64x128xf32>
    %c0_24 = arith.constant 0 : index
    %c0_25 = arith.constant 0 : index
    %45 = vector.load %arg9[%c0_24, %c0_25] : memref<1x128xf32, #tpu.memory_space<vmem>>, vector<1x128xf32>
    %46 = vector.broadcast %45 : vector<1x128xf32> to vector<64x128xf32>
    %47 = arith.addf %44, %46 : vector<64x128xf32>
    %cst_26 = arith.constant dense<0.000000e+00> : vector<128xf32>
    %48 = vector.multi_reduction <add>, %47, %cst_26 [0] : vector<64x128xf32> to vector<128xf32>
    %49 = vector.shape_cast %48 : vector<128xf32> to vector<1x128xf32>
    %50 = arith.mulf %47, %47 : vector<64x128xf32>
    %cst_27 = arith.constant dense<0.000000e+00> : vector<128xf32>
    %51 = vector.multi_reduction <add>, %50, %cst_27 [0] : vector<64x128xf32> to vector<128xf32>
    %52 = vector.shape_cast %51 : vector<128xf32> to vector<1x128xf32>
    %cst_28 = arith.constant 1.562500e-02 : f32
    %53 = vector.broadcast %cst_28 : f32 to vector<1x128xf32>
    %54 = arith.mulf %49, %53 : vector<1x128xf32>
    %cst_29 = arith.constant 1.562500e-02 : f32
    %55 = vector.broadcast %cst_29 : f32 to vector<1x128xf32>
    %56 = arith.mulf %52, %55 : vector<1x128xf32>
    %57 = arith.mulf %54, %54 : vector<1x128xf32>
    %58 = arith.subf %56, %57 : vector<1x128xf32>
    %cst_30 = arith.constant 0.000000e+00 : f32
    %59 = vector.broadcast %cst_30 : f32 to vector<1x128xf32>
    %60 = arith.maximumf %58, %59 : vector<1x128xf32>
    %61 = vector.broadcast %54 : vector<1x128xf32> to vector<64x128xf32>
    %62 = arith.subf %47, %61 : vector<64x128xf32>
    %cst_31 = arith.constant 9.99999974E-6 : f32
    %63 = vector.broadcast %cst_31 : f32 to vector<1x128xf32>
    %64 = arith.addf %60, %63 : vector<1x128xf32>
    %65 = math.rsqrt %64 : vector<1x128xf32>
    %c0_32 = arith.constant 0 : index
    %c0_33 = arith.constant 0 : index
    %66 = vector.load %arg10[%c0_32, %c0_33] : memref<1x128xf32, #tpu.memory_space<vmem>>, vector<1x128xf32>
    %67 = arith.mulf %65, %66 : vector<1x128xf32>
    %68 = vector.broadcast %67 : vector<1x128xf32> to vector<64x128xf32>
    %69 = arith.mulf %62, %68 : vector<64x128xf32>
    %c0_34 = arith.constant 0 : index
    %c0_35 = arith.constant 0 : index
    %70 = vector.load %arg11[%c0_34, %c0_35] : memref<1x128xf32, #tpu.memory_space<vmem>>, vector<1x128xf32>
    %71 = vector.broadcast %70 : vector<1x128xf32> to vector<64x128xf32>
    %72 = arith.addf %69, %71 : vector<64x128xf32>
    %cst_36 = arith.constant 0.000000e+00 : f32
    %73 = vector.broadcast %cst_36 : f32 to vector<64x128xf32>
    %74 = arith.maximumf %72, %73 : vector<64x128xf32>
    %c0_37 = arith.constant 0 : index
    %c0_38 = arith.constant 0 : index
    %75 = vector.load %arg12[%c0_37, %c0_38] : memref<64x128xf32, #tpu.memory_space<vmem>>, vector<64x128xf32>
    tpu.vector_store %arg12[%c0_37, %c0_38], %74 {strides = array<i32>} : memref<64x128xf32, #tpu.memory_space<vmem>>, vector<64x128xf32>,
    return
  }
  func.func @transform_0(%arg0: i32) -> (i32, i32) {
    %c0_i32 = arith.constant 0 : i32
    %c0_i32_0 = arith.constant 0 : i32
    %c0_i32_1 = arith.constant 0 : i32
    return %c0_i32, %c0_i32_0 : i32, i32
  }
  func.func @transform_1(%arg0: i32) -> (i32, i32) {
    %c0_i32 = arith.constant 0 : i32
    %c0_i32_0 = arith.constant 0 : i32
    %c0_i32_1 = arith.constant 0 : i32
    return %c0_i32, %c0_i32_0 : i32, i32
  }
  func.func @transform_2(%arg0: i32) -> (i32, i32) {
    %c0_i32 = arith.constant 0 : i32
    %c0_i32_0 = arith.constant 0 : i32
    %c0_i32_1 = arith.constant 0 : i32
    return %c0_i32, %c0_i32_0 : i32, i32
  }
  func.func @transform_3(%arg0: i32) -> (i32, i32) {
    %c0_i32 = arith.constant 0 : i32
    %c0_i32_0 = arith.constant 0 : i32
    %c0_i32_1 = arith.constant 0 : i32
    return %c0_i32, %c0_i32_0 : i32, i32
  }
  func.func @transform_4(%arg0: i32) -> (i32, i32) {
    %c0_i32 = arith.constant 0 : i32
    %c0_i32_0 = arith.constant 0 : i32
    %c0_i32_1 = arith.constant 0 : i32
    return %c0_i32, %c0_i32_0 : i32, i32
  }
  func.func @transform_5(%arg0: i32) -> (i32, i32) {
    %c0_i32 = arith.constant 0 : i32
    %c0_i32_0 = arith.constant 0 : i32
    %c0_i32_1 = arith.constant 0 : i32
    return %c0_i32, %c0_i32_0 : i32, i32
  }
  func.func @transform_6(%arg0: i32) -> (i32, i32) {
    %c0_i32 = arith.constant 0 : i32
    %c0_i32_0 = arith.constant 0 : i32
    %c0_i32_1 = arith.constant 0 : i32
    return %c0_i32, %c0_i32_0 : i32, i32
  }
  func.func @transform_7(%arg0: i32) -> (i32, i32) {
    %c0_i32 = arith.constant 0 : i32
    %c0_i32_0 = arith.constant 0 : i32
    %c0_i32_1 = arith.constant 0 : i32
    return %c0_i32, %c0_i32_0 : i32, i32
  }
  func.func @transform_8(%arg0: i32) -> (i32, i32) {
    %c0_i32 = arith.constant 0 : i32
    %c0_i32_0 = arith.constant 0 : i32
    %c0_i32_1 = arith.constant 0 : i32
    return %c0_i32, %c0_i32_0 : i32, i32
  }
  func.func @transform_9(%arg0: i32) -> (i32, i32) {
    %c0_i32 = arith.constant 0 : i32
    %c0_i32_0 = arith.constant 0 : i32
    %c0_i32_1 = arith.constant 0 : i32
    return %c0_i32, %c0_i32_0 : i32, i32
  }
  func.func @transform_10(%arg0: i32) -> (i32, i32) {
    %c0_i32 = arith.constant 0 : i32
    %c0_i32_0 = arith.constant 0 : i32
    %c0_i32_1 = arith.constant 0 : i32
    return %c0_i32, %c0_i32_0 : i32, i32
  }
  func.func @transform_11(%arg0: i32) -> (i32, i32) {
    %c0_i32 = arith.constant 0 : i32
    %c0_i32_0 = arith.constant 0 : i32
    %c0_i32_1 = arith.constant 0 : i32
    return %c0_i32, %c0_i32_0 : i32, i32
  }
}

</mosaic_0001>

<llo_original>
// kernel: layer_gin_forward.1
$region0: #{layer_gin_forward.1}
  #allocation0 [shape = 'u32[]', space=smem, size = 0x4, offset = 0x4, fixed_abs, tag = 'smem constant byte address 0x4 - core index']
  #allocation1 [shape = 'u32[144,128]{1,0:T(1,128)}', space=vmem, size = 0x12000, scoped, tag = 'internal scratch']
  #allocation2 [shape = 'f32[1,1]{1,0:T(1,128)S(6)}', space=smem, size = 0x200, scoped, tag = 'scoped memory for layer_gin_forward.1']
  %s0 = inlined_call_operand.<no memory space> [shape: f32[1,1], index: 0, kind: input, shape index: {}]
  %s1 = inlined_call_operand.vmem [shape: s8[64,64], index: 1, kind: input, shape index: {}]
  %s2 = inlined_call_operand.vmem [shape: bf16[64,128], index: 2, kind: input, shape index: {}]
  %s3 = inlined_call_operand.vmem [shape: bf16[128,128], index: 3, kind: input, shape index: {}]
  %s4 = inlined_call_operand.vmem [shape: f32[1,128], index: 4, kind: input, shape index: {}]
  %s5 = inlined_call_operand.vmem [shape: f32[1,128], index: 5, kind: input, shape index: {}]
  %s6 = inlined_call_operand.vmem [shape: f32[1,128], index: 6, kind: input, shape index: {}]
  %s7 = inlined_call_operand.vmem [shape: bf16[128,128], index: 7, kind: input, shape index: {}]
  %s8 = inlined_call_operand.vmem [shape: f32[1,128], index: 8, kind: input, shape index: {}]
  %s9 = inlined_call_operand.vmem [shape: f32[1,128], index: 9, kind: input, shape index: {}]
  %s10 = inlined_call_operand.vmem [shape: f32[1,128], index: 10, kind: input, shape index: {}]
  %s11 = inlined_call_operand.vmem [shape: f32[64,128], index: 11, kind: output, shape index: {}]
  %s12 = sld [smem:[#allocation0]]
  $region54: #{layer_gin_forward.1} parent=0
    _
  %s14 = ssub.s32 1, %s12
  %s15 = scalar_select 0, %s14, %s12
  %16 = sst [smem:[#allocation2]] %s0
  // Predicated region
  $region2: #{layer_gin_forward.1} parent=0 // pred_check
    _
  $region3: #{layer_gin_forward.1} parent=0 // pred_check_branch
    %18 = sbr.rel (0) target = $region5
  $region4: #{layer_gin_forward.1} parent=0 // pred_region
    _
  $region5: #{layer_gin_forward.1} parent=0 // pred_fallthru
    _
  // Predicated region
  $region6: #{layer_gin_forward.1} parent=0 // pred_check
    _
  $region7: #{layer_gin_forward.1} parent=0 // pred_check_branch
    %20 = sbr.rel (0) target = $region9
  $region8: #{layer_gin_forward.1} parent=0 // pred_region
    _
  $region9: #{layer_gin_forward.1} parent=0 // pred_fallthru
    _
  // Predicated region
  $region10: #{layer_gin_forward.1} parent=0 // pred_check
    _
  $region11: #{layer_gin_forward.1} parent=0 // pred_check_branch
    %22 = sbr.rel (0) target = $region13
  $region12: #{layer_gin_forward.1} parent=0 // pred_region
    _
  $region13: #{layer_gin_forward.1} parent=0 // pred_fallthru
    _
  // Predicated region
  $region14: #{layer_gin_forward.1} parent=0 // pred_check
    _
  $region15: #{layer_gin_forward.1} parent=0 // pred_check_branch
    %24 = sbr.rel (0) target = $region17
  $region16: #{layer_gin_forward.1} parent=0 // pred_region
    _
  $region17: #{layer_gin_forward.1} parent=0 // pred_fallthru
    _
  // Predicated region
  $region18: #{layer_gin_forward.1} parent=0 // pred_check
    _
  $region19: #{layer_gin_forward.1} parent=0 // pred_check_branch
    %26 = sbr.rel (0) target = $region21
  $region20: #{layer_gin_forward.1} parent=0 // pred_region
    _
  $region21: #{layer_gin_forward.1} parent=0 // pred_fallthru
    _
  // Predicated region
  $region22: #{layer_gin_forward.1} parent=0 // pred_check
    _
  $region23: #{layer_gin_forward.1} parent=0 // pred_check_branch
    %28 = sbr.rel (0) target = $region25
  $region24: #{layer_gin_forward.1} parent=0 // pred_region
    _
  $region25: #{layer_gin_forward.1} parent=0 // pred_fallthru
    _
  // Predicated region
  $region26: #{layer_gin_forward.1} parent=0 // pred_check
    _
  $region27: #{layer_gin_forward.1} parent=0 // pred_check_branch
    %30 = sbr.rel (0) target = $region29
  $region28: #{layer_gin_forward.1} parent=0 // pred_region
    _
  $region29: #{layer_gin_forward.1} parent=0 // pred_fallthru
    _
  // Predicated region
  $region30: #{layer_gin_forward.1} parent=0 // pred_check
    _
  $region31: #{layer_gin_forward.1} parent=0 // pred_check_branch
    %32 = sbr.rel (0) target = $region33
  $region32: #{layer_gin_forward.1} parent=0 // pred_region
    _
  $region33: #{layer_gin_forward.1} parent=0 // pred_fallthru
    _
  // Predicated region
  $region34: #{layer_gin_forward.1} parent=0 // pred_check
    _
  $region35: #{layer_gin_forward.1} parent=0 // pred_check_branch
    %34 = sbr.rel (0) target = $region37
  $region36: #{layer_gin_forward.1} parent=0 // pred_region
    _
  $region37: #{layer_gin_forward.1} parent=0 // pred_fallthru
    _
  // Predicated region
  $region38: #{layer_gin_forward.1} parent=0 // pred_check
    _
  $region39: #{layer_gin_forward.1} parent=0 // pred_check_branch
    %36 = sbr.rel (0) target = $region41
  $region40: #{layer_gin_forward.1} parent=0 // pred_region
    _
  $region41: #{layer_gin_forward.1} parent=0 // pred_fallthru
    _
  // Predicated region
  $region42: #{layer_gin_forward.1} parent=0 // pred_check
    _
  $region43: #{layer_gin_forward.1} parent=0 // pred_check_branch
    %38 = sbr.rel (0) target = $region45
  $region44: #{layer_gin_forward.1} parent=0 // pred_region
    _
  $region45: #{layer_gin_forward.1} parent=0 // pred_fallthru
    _
  %v40 = vld [vmem:[%s1] sm:$0xff]
  %v41 = vld [vmem:[%s1 + $0x8] sm:$0xff]
  %v42 = vunpack.c.l.s8.bf16 %v40
  %v43 = vunpack.c.h.s8.bf16 %v40
  %v44 = vunpack.c.l.s8.bf16 %v41
  %v45 = vunpack.c.h.s8.bf16 %v41
  %v46 = vld [vmem:[%s2] sm:$0xf]
  %v47 = vld [vmem:[%s2 + $0x4] sm:$0xf]
  %v48 = vld [vmem:[%s2 + $0x8] sm:$0xf]
  %v49 = vld [vmem:[%s2 + $0xc] sm:$0xf]
  %v50 = vld [vmem:[%s2 + $0x10] sm:$0xf]
  %v51 = vld [vmem:[%s2 + $0x14] sm:$0xf]
  %v52 = vld [vmem:[%s2 + $0x18] sm:$0xf]
  %v53 = vld [vmem:[%s2 + $0x1c] sm:$0xf]
  %s54 = sld [smem:[#allocation2]]
  %v55 = vunpack.c.l.bf16 %v46
  %v56 = vunpack.c.l.bf16 %v47
  %v57 = vunpack.c.l.bf16 %v48
  %v58 = vunpack.c.l.bf16 %v49
  %v59 = vunpack.c.l.bf16 %v50
  %v60 = vunpack.c.l.bf16 %v51
  %v61 = vunpack.c.l.bf16 %v52
  %v62 = vunpack.c.l.bf16 %v53
  %v63 = vstv %s54
  %v64 = vmul.f32 %v63, %v55
  %v65 = vmul.f32 %v63, %v56
  %v66 = vmul.f32 %v63, %v57
  %v67 = vmul.f32 %v63, %v58
  %v68 = vmul.f32 %v63, %v59
  %v69 = vmul.f32 %v63, %v60
  %v70 = vmul.f32 %v63, %v61
  %v71 = vmul.f32 %v63, %v62
  %v80 = vunpack.c.l.b16 %v46
  %v81 = vunpack.c.l.b16 %v47
  %v82 = vunpack.c.l.b16 %v48
  %v83 = vunpack.c.l.b16 %v49
  %v84 = vunpack.c.l.b16 %v50
  %v85 = vunpack.c.l.b16 %v51
  %v86 = vunpack.c.l.b16 %v52
  %v87 = vunpack.c.l.b16 %v53
  %v88 = vpack.c.b16 %v81, %v80
  %v89 = vpack.c.b16 %v83, %v82
  %v90 = vpack.c.b16 %v85, %v84
  %v91 = vpack.c.b16 %v87, %v86
  %vm96 = vcmask 523264
  %v98 = vsel %vm96, %v42, 0
  %v101 = vsel %vm96, %v43, 0
  %v104 = vsel %vm96, %v44, 0
  %v107 = vsel %vm96, %v45, 0
  %109 = vmatprep.subr.bf16.mxu0 0
  %110 = vmatpush1.bf16.msra.mxu0 %v88
  %111 = vmatprep.subr.bf16.mxu0 0
  %112 = vmatpush1.bf16.msra.mxu0 %v89
  %113 = vmatprep.subr.bf16.mxu0 0
  %114 = vmatpush1.bf16.msra.mxu0 %v90
  %115 = vmatprep.subr.bf16.mxu0 0
  %116 = vmatpush1.bf16.msra.mxu0 %v91
  %117 = vmatprep.subr.bf16.mxu0 0
  %118 = vmatpush1.bf16.msra.mxu0 0
  %119 = vmatprep.subr.bf16.mxu0 0
  %120 = vmatpush1.bf16.msra.mxu0 0
  %121 = vmatprep.subr.bf16.mxu0 0
  %122 = vmatpush1.bf16.msra.mxu0 0
  %123 = vmatprep.subr.bf16.mxu0 0
  %124 = vmatpush1.bf16.msra.mxu0 0
  %125 = vmatprep.subr.bf16.mxu0 0
  %126 = vmatpush1.bf16.msra.mxu0 0
  %127 = vmatprep.subr.bf16.mxu0 0
  %128 = vmatpush1.bf16.msra.mxu0 0
  %129 = vmatprep.subr.bf16.mxu0 0
  %130 = vmatpush1.bf16.msra.mxu0 0
  %131 = vmatprep.subr.bf16.mxu0 0
  %132 = vmatpush1.bf16.msra.mxu0 0
  %133 = vmatprep.subr.bf16.mxu0 0
  %134 = vmatpush1.bf16.msra.mxu0 0
  %135 = vmatprep.subr.bf16.mxu0 0
  %136 = vmatpush1.bf16.msra.mxu0 0
  %137 = vmatprep.subr.bf16.mxu0 0
  %138 = vmatpush1.bf16.msra.mxu0 0
  %139 = vmatprep.subr.bf16.mxu0 0
  %140 = vmatpush1.bf16.msra.mxu0 0
  %141 = vmatprep.mubr.bf16.mxu0 0
  %142 = vmatmul.mubr.bf16.gmra.mrb[0].mxu0 %v98
  %v143 = vpop.f32.mrb[0].mxu0
  %v144 = vadd.f32 %v64, %v143
  %v145 = vpop.f32.mrb[0].mxu0
  %v146 = vpop.f32.mrb[0].mxu0
  %v147 = vadd.f32 %v65, %v146
  %v148 = vpop.f32.mrb[0].mxu0
  %149 = vmatprep.mubr.bf16.mxu0 0
  %150 = vmatmul.mubr.bf16.gmra.mrb[0].mxu0 %v101
  %v151 = vpop.f32.mrb[0].mxu0
  %v152 = vadd.f32 %v66, %v151
  %v153 = vpop.f32.mrb[0].mxu0
  %v154 = vpop.f32.mrb[0].mxu0
  %v155 = vadd.f32 %v67, %v154
  %v156 = vpop.f32.mrb[0].mxu0
  %157 = vmatprep.mubr.bf16.mxu0 0
  %158 = vmatmul.mubr.bf16.gmra.mrb[0].mxu0 %v104
  %v159 = vpop.f32.mrb[0].mxu0
  %v160 = vadd.f32 %v68, %v159
  %v161 = vpop.f32.mrb[0].mxu0
  %v162 = vpop.f32.mrb[0].mxu0
  %v163 = vadd.f32 %v69, %v162
  %v164 = vpop.f32.mrb[0].mxu0
  %165 = vmatprep.mubr.bf16.mxu0 0
  %166 = vmatmul.mubr.bf16.gmra.mrb[0].mxu0 %v107
  %v167 = vpop.f32.mrb[0].mxu0
  %v168 = vadd.f32 %v70, %v167
  %v169 = vpop.f32.mrb[0].mxu0
  %v170 = vpop.f32.mrb[0].mxu0
  %v171 = vadd.f32 %v71, %v170
  %v172 = vpop.f32.mrb[0].mxu0
  %173 = vdwg.mxu0
  %v174 = vpack.c.bf16 %v147, %v144
  %v175 = vpack.c.bf16 %v155, %v152
  %v176 = vpack.c.bf16 %v163, %v160
  %v177 = vpack.c.bf16 %v171, %v168
  %v178 = vld [vmem:[%s3] sm:$0xf]
  %v179 = vld [vmem:[%s3 + $0x4] sm:$0xf]
  %v180 = vld [vmem:[%s3 + $0x8] sm:$0xf]
  %v181 = vld [vmem:[%s3 + $0xc] sm:$0xf]
  %v182 = vld [vmem:[%s3 + $0x10] sm:$0xf]
  %v183 = vld [vmem:[%s3 + $0x14] sm:$0xf]
  %v184 = vld [vmem:[%s3 + $0x18] sm:$0xf]
  %v185 = vld [vmem:[%s3 + $0x1c] sm:$0xf]
  %v186 = vld [vmem:[%s3 + $0x20] sm:$0xf]
  %v187 = vld [vmem:[%s3 + $0x24] sm:$0xf]
  %v188 = vld [vmem:[%s3 + $0x28] sm:$0xf]
  %v189 = vld [vmem:[%s3 + $0x2c] sm:$0xf]
  %v190 = vld [vmem:[%s3 + $0x30] sm:$0xf]
  %v191 = vld [vmem:[%s3 + $0x34] sm:$0xf]
  %v192 = vld [vmem:[%s3 + $0x38] sm:$0xf]
  %v193 = vld [vmem:[%s3 + $0x3c] sm:$0xf]
  %v194 = vld [vmem:[%s4] sm:$0x1]
  %v196 = vlaneseq
  %v197 = vshrl.u32 %v196, 7
  %v198 = vsub.s32 0, %v197
  %v199 = vrot.slane %v194, %v198
  %v217 = vunpack.c.l.b16 %v178
  %v218 = vunpack.c.l.b16 %v179
  %v219 = vunpack.c.l.b16 %v180
  %v220 = vunpack.c.l.b16 %v181
  %v221 = vunpack.c.l.b16 %v182
  %v222 = vunpack.c.l.b16 %v183
  %v223 = vunpack.c.l.b16 %v184
  %v224 = vunpack.c.l.b16 %v185
  %v225 = vunpack.c.l.b16 %v186
  %v226 = vunpack.c.l.b16 %v187
  %v227 = vunpack.c.l.b16 %v188
  %v228 = vunpack.c.l.b16 %v189
  %v229 = vunpack.c.l.b16 %v190
  %v230 = vunpack.c.l.b16 %v191
  %v231 = vunpack.c.l.b16 %v192
  %v232 = vunpack.c.l.b16 %v193
  %v233 = vpack.c.b16 %v218, %v217
  %v234 = vpack.c.b16 %v220, %v219
  %v235 = vpack.c.b16 %v222, %v221
  %v236 = vpack.c.b16 %v224, %v223
  %v237 = vpack.c.b16 %v226, %v225
  %v238 = vpack.c.b16 %v228, %v227
  %v239 = vpack.c.b16 %v230, %v229
  %v240 = vpack.c.b16 %v232, %v231
  %249 = vmatprep.subr.bf16.mxu0 0
  %250 = vmatpush1.bf16.msra.mxu0 %v233
  %251 = vmatprep.subr.bf16.mxu0 0
  %252 = vmatpush1.bf16.msra.mxu0 %v234
  %253 = vmatprep.subr.bf16.mxu0 0
  %254 = vmatpush1.bf16.msra.mxu0 %v235
  %255 = vmatprep.subr.bf16.mxu0 0
  %256 = vmatpush1.bf16.msra.mxu0 %v236
  %257 = vmatprep.subr.bf16.mxu0 0
  %258 = vmatpush1.bf16.msra.mxu0 %v237
  %259 = vmatprep.subr.bf16.mxu0 0
  %260 = vmatpush1.bf16.msra.mxu0 %v238
  %261 = vmatprep.subr.bf16.mxu0 0
  %262 = vmatpush1.bf16.msra.mxu0 %v239
  %263 = vmatprep.subr.bf16.mxu0 0
  %264 = vmatpush1.bf16.msra.mxu0 %v240
  %265 = vmatprep.subr.bf16.mxu0 0
  %266 = vmatpush1.bf16.msra.mxu0 0
  %267 = vmatprep.subr.bf16.mxu0 0
  %268 = vmatpush1.bf16.msra.mxu0 0
  %269 = vmatprep.subr.bf16.mxu0 0
  %270 = vmatpush1.bf16.msra.mxu0 0
  %271 = vmatprep.subr.bf16.mxu0 0
  %272 = vmatpush1.bf16.msra.mxu0 0
  %273 = vmatprep.subr.bf16.mxu0 0
  %274 = vmatpush1.bf16.msra.mxu0 0
  %275 = vmatprep.subr.bf16.mxu0 0
  %276 = vmatpush1.bf16.msra.mxu0 0
  %277 = vmatprep.subr.bf16.mxu0 0
  %278 = vmatpush1.bf16.msra.mxu0 0
  %279 = vmatprep.subr.bf16.mxu0 0
  %280 = vmatpush1.bf16.msra.mxu0 0
  %281 = vmatprep.mubr.bf16.mxu0 0
  %282 = vmatmul.mubr.bf16.gmra.mrb[0].mxu0 %v174
  %v283 = vpop.f32.mrb[0].mxu0
  %v284 = vadd.f32 %v199, %v283
  %v285 = vpop.f32.mrb[0].mxu0
  %v286 = vpop.f32.mrb[0].mxu0
  %v287 = vadd.f32 %v199, %v286
  %v288 = vpop.f32.mrb[0].mxu0
  %289 = vmatprep.mubr.bf16.mxu0 0
  %290 = vmatmul.mubr.bf16.gmra.mrb[0].mxu0 %v175
  %v291 = vpop.f32.mrb[0].mxu0
  %v292 = vadd.f32 %v199, %v291
  %v293 = vpop.f32.mrb[0].mxu0
  %v294 = vpop.f32.mrb[0].mxu0
  %v295 = vadd.f32 %v199, %v294
  %v296 = vpop.f32.mrb[0].mxu0
  %297 = vmatprep.mubr.bf16.mxu0 0
  %298 = vmatmul.mubr.bf16.gmra.mrb[0].mxu0 %v176
  %v299 = vpop.f32.mrb[0].mxu0
  %v300 = vadd.f32 %v199, %v299
  %v301 = vpop.f32.mrb[0].mxu0
  %v302 = vpop.f32.mrb[0].mxu0
  %v303 = vadd.f32 %v199, %v302
  %v304 = vpop.f32.mrb[0].mxu0
  %305 = vmatprep.mubr.bf16.mxu0 0
  %306 = vmatmul.mubr.bf16.gmra.mrb[0].mxu0 %v177
  %v307 = vpop.f32.mrb[0].mxu0
  %v308 = vadd.f32 %v199, %v307
  %v309 = vpop.f32.mrb[0].mxu0
  %v310 = vpop.f32.mrb[0].mxu0
  %v311 = vadd.f32 %v199, %v310
  %v312 = vpop.f32.mrb[0].mxu0
  %313 = vdwg.mxu0
  %v314 = vadd.f32 %v284, %v287
  %v315 = vadd.f32 %v314, %v292
  %v316 = vadd.f32 %v315, %v295
  %v317 = vadd.f32 %v316, %v300
  %v318 = vadd.f32 %v317, %v303
  %v319 = vadd.f32 %v318, %v308
  %v320 = vadd.f32 %v319, %v311
  %v321 = vrot.slane %v320, 4
  %v322 = vadd.f32 %v320, %v321
  %v323 = vrot.slane %v322, 2
  %v324 = vadd.f32 %v322, %v323
  %v325 = vrot.slane %v324, 1
  %v326 = vadd.f32 %v324, %v325
  %v327 = vmul.f32 %v284, %v284
  %v328 = vmul.f32 %v287, %v287
  %v329 = vmul.f32 %v292, %v292
  %v330 = vmul.f32 %v295, %v295
  %v331 = vmul.f32 %v300, %v300
  %v332 = vmul.f32 %v303, %v303
  %v333 = vmul.f32 %v308, %v308
  %v334 = vmul.f32 %v311, %v311
  %v335 = vadd.f32 %v327, %v328
  %v336 = vadd.f32 %v335, %v329
  %v337 = vadd.f32 %v336, %v330
  %v338 = vadd.f32 %v337, %v331
  %v339 = vadd.f32 %v338, %v332
  %v340 = vadd.f32 %v339, %v333
  %v341 = vadd.f32 %v340, %v334
  %v342 = vrot.slane %v341, 4
  %v343 = vadd.f32 %v341, %v342
  %v344 = vrot.slane %v343, 2
  %v345 = vadd.f32 %v343, %v344
  %v346 = vrot.slane %v345, 1
  %v347 = vadd.f32 %v345, %v346
  %v348 = vmul.f32 %v326, 0.015625
  %v349 = vmul.f32 %v347, 0.015625
  %v350 = vmul.f32 %v348, %v348
  %v351 = vsub.f32 %v349, %v350
  %v352 = vmax.f32 %v351, 0.0
  %v353 = vsub.f32 %v284, %v348
  %v354 = vsub.f32 %v287, %v348
  %v355 = vsub.f32 %v292, %v348
  %v356 = vsub.f32 %v295, %v348
  %v357 = vsub.f32 %v300, %v348
  %v358 = vsub.f32 %v303, %v348
  %v359 = vsub.f32 %v308, %v348
  %v360 = vsub.f32 %v311, %v348
  %v361 = vadd.f32 %v352, 1e-05
  %v362 = vrsqrt.pop %v361
  %v363 = vld [vmem:[%s5] sm:$0x1]
  %v364 = vmul.f32 %v362, %v363
  %v365 = vlaneseq
  %v366 = vshrl.u32 %v365, 7
  %v367 = vsub.s32 0, %v366
  %v368 = vrot.slane %v364, %v367
  %v369 = vmul.f32 %v353, %v368
  %v370 = vmul.f32 %v354, %v368
  %v371 = vmul.f32 %v355, %v368
  %v372 = vmul.f32 %v356, %v368
  %v373 = vmul.f32 %v357, %v368
  %v374 = vmul.f32 %v358, %v368
  %v375 = vmul.f32 %v359, %v368
  %v376 = vmul.f32 %v360, %v368
  %v377 = vld [vmem:[%s6] sm:$0x1]
  %v379 = vlaneseq
  %v380 = vshrl.u32 %v379, 7
  %v381 = vsub.s32 0, %v380
  %v382 = vrot.slane %v377, %v381
  %v384 = vadd.f32 %v369, %v382
  %v385 = vadd.f32 %v370, %v382
  %v386 = vadd.f32 %v371, %v382
  %v387 = vadd.f32 %v372, %v382
  %v388 = vadd.f32 %v373, %v382
  %v389 = vadd.f32 %v374, %v382
  %v390 = vadd.f32 %v375, %v382
  %v391 = vadd.f32 %v376, %v382
  %v392 = vmax.f32 %v384, 0.0
  %v393 = vmax.f32 %v385, 0.0
  %v394 = vmax.f32 %v386, 0.0
  %v395 = vmax.f32 %v387, 0.0
  %v396 = vmax.f32 %v388, 0.0
  %v397 = vmax.f32 %v389, 0.0
  %v398 = vmax.f32 %v390, 0.0
  %v399 = vmax.f32 %v391, 0.0
  %v400 = vpack.c.bf16 %v393, %v392
  %v401 = vpack.c.bf16 %v395, %v394
  %v402 = vpack.c.bf16 %v397, %v396
  %v403 = vpack.c.bf16 %v399, %v398
  %v404 = vld [vmem:[%s7] sm:$0xf]
  %v405 = vld [vmem:[%s7 + $0x4] sm:$0xf]
  %v406 = vld [vmem:[%s7 + $0x8] sm:$0xf]
  %v407 = vld [vmem:[%s7 + $0xc] sm:$0xf]
  %v408 = vld [vmem:[%s7 + $0x10] sm:$0xf]
  %v409 = vld [vmem:[%s7 + $0x14] sm:$0xf]
  %v410 = vld [vmem:[%s7 + $0x18] sm:$0xf]
  %v411 = vld [vmem:[%s7 + $0x1c] sm:$0xf]
  %v412 = vld [vmem:[%s7 + $0x20] sm:$0xf]
  %v413 = vld [vmem:[%s7 + $0x24] sm:$0xf]
  %v414 = vld [vmem:[%s7 + $0x28] sm:$0xf]
  %v415 = vld [vmem:[%s7 + $0x2c] sm:$0xf]
  %v416 = vld [vmem:[%s7 + $0x30] sm:$0xf]
  %v417 = vld [vmem:[%s7 + $0x34] sm:$0xf]
  %v418 = vld [vmem:[%s7 + $0x38] sm:$0xf]
  %v419 = vld [vmem:[%s7 + $0x3c] sm:$0xf]
  %v420 = vld [vmem:[%s8] sm:$0x1]
  %v422 = vlaneseq
  %v423 = vshrl.u32 %v422, 7
  %v424 = vsub.s32 0, %v423
  %v425 = vrot.slane %v420, %v424
  %v443 = vunpack.c.l.b16 %v404
  %v444 = vunpack.c.l.b16 %v405
  %v445 = vunpack.c.l.b16 %v406
  %v446 = vunpack.c.l.b16 %v407
  %v447 = vunpack.c.l.b16 %v408
  %v448 = vunpack.c.l.b16 %v409
  %v449 = vunpack.c.l.b16 %v410
  %v450 = vunpack.c.l.b16 %v411
  %v451 = vunpack.c.l.b16 %v412
  %v452 = vunpack.c.l.b16 %v413
  %v453 = vunpack.c.l.b16 %v414
  %v454 = vunpack.c.l.b16 %v415
  %v455 = vunpack.c.l.b16 %v416
  %v456 = vunpack.c.l.b16 %v417
  %v457 = vunpack.c.l.b16 %v418
  %v458 = vunpack.c.l.b16 %v419
  %v459 = vpack.c.b16 %v444, %v443
  %v460 = vpack.c.b16 %v446, %v445
  %v461 = vpack.c.b16 %v448, %v447
  %v462 = vpack.c.b16 %v450, %v449
  %v463 = vpack.c.b16 %v452, %v451
  %v464 = vpack.c.b16 %v454, %v453
  %v465 = vpack.c.b16 %v456, %v455
  %v466 = vpack.c.b16 %v458, %v457
  %475 = vmatprep.subr.bf16.mxu0 0
  %476 = vmatpush1.bf16.msra.mxu0 %v459
  %477 = vmatprep.subr.bf16.mxu0 0
  %478 = vmatpush1.bf16.msra.mxu0 %v460
  %479 = vmatprep.subr.bf16.mxu0 0
  %480 = vmatpush1.bf16.msra.mxu0 %v461
  %481 = vmatprep.subr.bf16.mxu0 0
  %482 = vmatpush1.bf16.msra.mxu0 %v462
  %483 = vmatprep.subr.bf16.mxu0 0
  %484 = vmatpush1.bf16.msra.mxu0 %v463
  %485 = vmatprep.subr.bf16.mxu0 0
  %486 = vmatpush1.bf16.msra.mxu0 %v464
  %487 = vmatprep.subr.bf16.mxu0 0
  %488 = vmatpush1.bf16.msra.mxu0 %v465
  %489 = vmatprep.subr.bf16.mxu0 0
  %490 = vmatpush1.bf16.msra.mxu0 %v466
  %491 = vmatprep.subr.bf16.mxu0 0
  %492 = vmatpush1.bf16.msra.mxu0 0
  %493 = vmatprep.subr.bf16.mxu0 0
  %494 = vmatpush1.bf16.msra.mxu0 0
  %495 = vmatprep.subr.bf16.mxu0 0
  %496 = vmatpush1.bf16.msra.mxu0 0
  %497 = vmatprep.subr.bf16.mxu0 0
  %498 = vmatpush1.bf16.msra.mxu0 0
  %499 = vmatprep.subr.bf16.mxu0 0
  %500 = vmatpush1.bf16.msra.mxu0 0
  %501 = vmatprep.subr.bf16.mxu0 0
  %502 = vmatpush1.bf16.msra.mxu0 0
  %503 = vmatprep.subr.bf16.mxu0 0
  %504 = vmatpush1.bf16.msra.mxu0 0
  %505 = vmatprep.subr.bf16.mxu0 0
  %506 = vmatpush1.bf16.msra.mxu0 0
  %507 = vmatprep.mubr.bf16.mxu0 0
  %508 = vmatmul.mubr.bf16.gmra.mrb[0].mxu0 %v400
  %v509 = vpop.f32.mrb[0].mxu0
  %v510 = vadd.f32 %v425, %v509
  %v511 = vpop.f32.mrb[0].mxu0
  %v512 = vpop.f32.mrb[0].mxu0
  %v513 = vadd.f32 %v425, %v512
  %v514 = vpop.f32.mrb[0].mxu0
  %515 = vmatprep.mubr.bf16.mxu0 0
  %516 = vmatmul.mubr.bf16.gmra.mrb[0].mxu0 %v401
  %v517 = vpop.f32.mrb[0].mxu0
  %v518 = vadd.f32 %v425, %v517
  %v519 = vpop.f32.mrb[0].mxu0
  %v520 = vpop.f32.mrb[0].mxu0
  %v521 = vadd.f32 %v425, %v520
  %v522 = vpop.f32.mrb[0].mxu0
  %523 = vmatprep.mubr.bf16.mxu0 0
  %524 = vmatmul.mubr.bf16.gmra.mrb[0].mxu0 %v402
  %v525 = vpop.f32.mrb[0].mxu0
  %v526 = vadd.f32 %v425, %v525
  %v527 = vpop.f32.mrb[0].mxu0
  %v528 = vpop.f32.mrb[0].mxu0
  %v529 = vadd.f32 %v425, %v528
  %v530 = vpop.f32.mrb[0].mxu0
  %531 = vmatprep.mubr.bf16.mxu0 0
  %532 = vmatmul.mubr.bf16.gmra.mrb[0].mxu0 %v403
  %v533 = vpop.f32.mrb[0].mxu0
  %v534 = vadd.f32 %v425, %v533
  %v535 = vpop.f32.mrb[0].mxu0
  %v536 = vpop.f32.mrb[0].mxu0
  %v537 = vadd.f32 %v425, %v536
  %v538 = vpop.f32.mrb[0].mxu0
  %539 = vdwg.mxu0
  %v540 = vadd.f32 %v510, %v513
  %v541 = vadd.f32 %v540, %v518
  %v542 = vadd.f32 %v541, %v521
  %v543 = vadd.f32 %v542, %v526
  %v544 = vadd.f32 %v543, %v529
  %v545 = vadd.f32 %v544, %v534
  %v546 = vadd.f32 %v545, %v537
  %v547 = vrot.slane %v546, 4
  %v548 = vadd.f32 %v546, %v547
  %v549 = vrot.slane %v548, 2
  %v550 = vadd.f32 %v548, %v549
  %v551 = vrot.slane %v550, 1
  %v552 = vadd.f32 %v550, %v551
  %v553 = vmul.f32 %v510, %v510
  %v554 = vmul.f32 %v513, %v513
  %v555 = vmul.f32 %v518, %v518
  %v556 = vmul.f32 %v521, %v521
  %v557 = vmul.f32 %v526, %v526
  %v558 = vmul.f32 %v529, %v529
  %v559 = vmul.f32 %v534, %v534
  %v560 = vmul.f32 %v537, %v537
  %v561 = vadd.f32 %v553, %v554
  %v562 = vadd.f32 %v561, %v555
  %v563 = vadd.f32 %v562, %v556
  %v564 = vadd.f32 %v563, %v557
  %v565 = vadd.f32 %v564, %v558
  %v566 = vadd.f32 %v565, %v559
  %v567 = vadd.f32 %v566, %v560
  %v568 = vrot.slane %v567, 4
  %v569 = vadd.f32 %v567, %v568
  %v570 = vrot.slane %v569, 2
  %v571 = vadd.f32 %v569, %v570
  %v572 = vrot.slane %v571, 1
  %v573 = vadd.f32 %v571, %v572
  %v574 = vmul.f32 %v552, 0.015625
  %v575 = vmul.f32 %v573, 0.015625
  %v576 = vmul.f32 %v574, %v574
  %v577 = vsub.f32 %v575, %v576
  %v578 = vmax.f32 %v577, 0.0
  %v579 = vsub.f32 %v510, %v574
  %v580 = vsub.f32 %v513, %v574
  %v581 = vsub.f32 %v518, %v574
  %v582 = vsub.f32 %v521, %v574
  %v583 = vsub.f32 %v526, %v574
  %v584 = vsub.f32 %v529, %v574
  %v585 = vsub.f32 %v534, %v574
  %v586 = vsub.f32 %v537, %v574
  %v587 = vadd.f32 %v578, 1e-05
  %v588 = vrsqrt.pop %v587
  %v589 = vld [vmem:[%s9] sm:$0x1]
  %v590 = vmul.f32 %v588, %v589
  %v591 = vlaneseq
  %v592 = vshrl.u32 %v591, 7
  %v593 = vsub.s32 0, %v592
  %v594 = vrot.slane %v590, %v593
  %v595 = vmul.f32 %v579, %v594
  %v596 = vmul.f32 %v580, %v594
  %v597 = vmul.f32 %v581, %v594
  %v598 = vmul.f32 %v582, %v594
  %v599 = vmul.f32 %v583, %v594
  %v600 = vmul.f32 %v584, %v594
  %v601 = vmul.f32 %v585, %v594
  %v602 = vmul.f32 %v586, %v594
  %v603 = vld [vmem:[%s10] sm:$0x1]
  %v605 = vlaneseq
  %v606 = vshrl.u32 %v605, 7
  %v607 = vsub.s32 0, %v606
  %v608 = vrot.slane %v603, %v607
  %v610 = vadd.f32 %v595, %v608
  %v611 = vadd.f32 %v596, %v608
  %v612 = vadd.f32 %v597, %v608
  %v613 = vadd.f32 %v598, %v608
  %v614 = vadd.f32 %v599, %v608
  %v615 = vadd.f32 %v600, %v608
  %v616 = vadd.f32 %v601, %v608
  %v617 = vadd.f32 %v602, %v608
  %v618 = vmax.f32 %v610, 0.0
  %v619 = vmax.f32 %v611, 0.0
  %v620 = vmax.f32 %v612, 0.0
  %v621 = vmax.f32 %v613, 0.0
  %v622 = vmax.f32 %v614, 0.0
  %v623 = vmax.f32 %v615, 0.0
  %v624 = vmax.f32 %v616, 0.0
  %v625 = vmax.f32 %v617, 0.0
  %626 = vst [vmem:[%s11] sm:$0xff] %v618
  %627 = vst [vmem:[%s11 + $0x8] sm:$0xff] %v619
  %628 = vst [vmem:[%s11 + $0x10] sm:$0xff] %v620
  %629 = vst [vmem:[%s11 + $0x18] sm:$0xff] %v621
  %630 = vst [vmem:[%s11 + $0x20] sm:$0xff] %v622
  %631 = vst [vmem:[%s11 + $0x28] sm:$0xff] %v623
  %632 = vst [vmem:[%s11 + $0x30] sm:$0xff] %v624
  %633 = vst [vmem:[%s11 + $0x38] sm:$0xff] %v625
  // Predicated region
  $region46: #{layer_gin_forward.1} parent=0 // pred_check
    _
  $region47: #{layer_gin_forward.1} parent=0 // pred_check_branch
    %635 = sbr.rel (0) target = $region49
  $region48: #{layer_gin_forward.1} parent=0 // pred_region
    _
  $region49: #{layer_gin_forward.1} parent=0 // pred_fallthru
    _
  // Predicated region
  $region50: #{layer_gin_forward.1} parent=0 // pred_check
    _
  $region51: #{layer_gin_forward.1} parent=0 // pred_check_branch
    %637 = sbr.rel (0) target = $region53
  $region52: #{layer_gin_forward.1} parent=0 // pred_region
    _
  $region53: #{layer_gin_forward.1} parent=0 // pred_fallthru
    _

</llo_original>
